<compile_context>
chip_gen: v7x
topology: tpu7x:2x2x1
jax: 0.10.0
libtpu: 0.0.40
codegen_flags: <defaults>
</compile_context>

<pallas_src>
import jax
import jax.numpy as jnp
from jax.experimental import pallas as pl
from jax.experimental.pallas import tpu as pltpu

OUT_LANES = 128  # one vreg row / one MXU tile; ge + predictions fit in 12 lanes


def _rpad(r):
    """Round a row count up to a full sublane group (multiple of 8, minimum 8)."""
    return max(8, ((r + 7) // 8) * 8)


def _make_layout(n, f, d1, d2, num_graphs, h_fc1, n_labels):
    """Row offsets of each logical tensor inside the packed (R, 128) operand slab."""
    assert h_fc1 + n_labels <= OUT_LANES
    n_pad = _rpad(n)
    g_pad = _rpad(num_graphs)
    off = {}
    row = 0
    for name, rows in (("a", n_pad), ("x", n_pad), ("w1", _rpad(f)), ("b1", 8),
                       ("w2", _rpad(d1)), ("b2", 8), ("p", g_pad),
                       ("wc", _rpad(d2)), ("bc", 8)):
        off[name] = row
        row += rows
    return dict(off=off, rows=row, n=n, f=f, d1=d1, d2=d2,
                n_pad=n_pad, g_pad=g_pad, h_fc1=h_fc1, n_labels=n_labels)


def pack_sage_slab(layout, a_hat, x, w1, b1, w2, b2, wf1, bf1, pool, wf2, bf2):
    """Pack every operand into one lane-dense (R, 128) f32 slab (fc2 folded into fc1).

    Zero padding is benign: padded A_hat rows/cols, padded X rows and padded pool cols are
    zero, so padded node rows never reach the pooled result.  Compute once per graph /
    parameter set and reuse across forward calls.
    """
    o = layout["off"]
    n, f, d1, d2 = layout["n"], layout["f"], layout["d1"], layout["d2"]
    h_fc1, lbl = layout["h_fc1"], layout["n_labels"]
    g = pool.shape[0]

    # Fold fc2 into fc1 (exact: no nonlinearity in between, dropout identity in eval).
    w_combo = jnp.zeros((d2, OUT_LANES), jnp.float32)
    w_combo = w_combo.at[:, :h_fc1].set(wf1)
    w_combo = w_combo.at[:, h_fc1:h_fc1 + lbl].set(wf1 @ wf2)
    b_combo = jnp.zeros((1, OUT_LANES), jnp.float32)
    b_combo = b_combo.at[:, :h_fc1].set(bf1)
    b_combo = b_combo.at[:, h_fc1:h_fc1 + lbl].set(bf1 @ wf2 + bf2)

    slab = jnp.zeros((layout["rows"], OUT_LANES), jnp.float32)
    slab = slab.at[o["a"]:o["a"] + n, :n].set(a_hat)
    slab = slab.at[o["x"]:o["x"] + n, :f].set(x)
    slab = slab.at[o["w1"]:o["w1"] + f, :d1].set(w1)
    slab = slab.at[o["b1"]:o["b1"] + 1, :d1].set(b1)
    slab = slab.at[o["w2"]:o["w2"] + d1, :d2].set(w2)
    slab = slab.at[o["b2"]:o["b2"] + 1, :d2].set(b2)
    slab = slab.at[o["p"]:o["p"] + g, :n].set(pool)
    slab = slab.at[o["wc"]:o["wc"] + d2, :].set(w_combo)
    slab = slab.at[o["bc"]:o["bc"] + 1, :].set(b_combo)
    return slab


# ----------------------------- Pallas kernel ---------------------------------
def _make_kernel(layout):
    o = layout["off"]
    n_pad, f, d1, d2 = layout["n_pad"], layout["f"], layout["d1"], layout["d2"]
    g_pad = layout["g_pad"]
    f32 = jnp.float32

    def sage_kernel(slab_ref, out_ref):
        # Static slices of the single packed slab (sublane offsets are multiples of 8).
        a   = slab_ref[o["a"]:o["a"] + n_pad, :n_pad]
        xv  = slab_ref[o["x"]:o["x"] + n_pad, :f]
        w1v = slab_ref[o["w1"]:o["w1"] + f, :d1]
        b1v = slab_ref[o["b1"]:o["b1"] + 1, :d1]
        w2v = slab_ref[o["w2"]:o["w2"] + d1, :d2]
        b2v = slab_ref[o["b2"]:o["b2"] + 1, :d2]
        pv  = slab_ref[o["p"]:o["p"] + g_pad, :n_pad]
        wcv = slab_ref[o["wc"]:o["wc"] + d2, :]
        bcv = slab_ref[o["bc"]:o["bc"] + 1, :]

        # GCN layer 1: relu( A_hat @ (X @ W1) + b1 )
        xw1 = jnp.dot(xv, w1v, preferred_element_type=f32)
        h1 = jnp.maximum(jnp.dot(a, xw1, preferred_element_type=f32) + b1v, 0.0)

        # GCN layer 2: relu( A_hat @ (H1 @ W2) + b2 )
        hw2 = jnp.dot(h1, w2v, preferred_element_type=f32)
        h2 = jnp.maximum(jnp.dot(a, hw2, preferred_element_type=f32) + b2v, 0.0)

        # Mean-pool BEFORE the dense layers (rows of P sum to 1; dropout identity in eval),
        # then a single folded fc1+fc2 matmul: graph_embedding lands in lanes [0, h_fc1),
        # ic_predictions in lanes [h_fc1, h_fc1+L).  One unmasked lane-dense store.
        pooled = jnp.dot(pv, h2, preferred_element_type=f32)
        out_ref[...] = jnp.dot(pooled, wcv, preferred_element_type=f32) + bcv

    return sage_kernel


def run_sage_kernel(layout, slab):
    n_pad, f, d1, d2 = layout["n_pad"], layout["f"], layout["d1"], layout["d2"]
    g_pad = layout["g_pad"]

    flops = 2 * (n_pad * f * d1 + n_pad * n_pad * d1 + n_pad * d1 * d2
                 + n_pad * n_pad * d2 + g_pad * n_pad * d2 + g_pad * d2 * OUT_LANES)
    bytes_accessed = int(slab.size) * 4 + g_pad * OUT_LANES * 4

    vmem = pl.BlockSpec(memory_space=pltpu.MemorySpace.VMEM)
    return pl.pallas_call(
        _make_kernel(layout),
        out_shape=jax.ShapeDtypeStruct((g_pad, OUT_LANES), jnp.float32),
        in_specs=[vmem],
        out_specs=vmem,
        cost_estimate=pl.CostEstimate(flops=flops, transcendentals=0,
                                      bytes_accessed=bytes_accessed),
    )(slab)


def sage_forward(a_hat, x, w1, b1, w2, b2, wf1, bf1, pool, wf2, bf2,
                 *, num_graphs, n_labels):
    n, f = x.shape
    d1, d2 = w1.shape[1], w2.shape[1]
    h_fc1 = wf1.shape[1]
    assert wf2.shape[0] == h_fc1, "fc2 input dim must match fc1 output dim"

    layout = _make_layout(n, f, d1, d2, num_graphs, h_fc1, n_labels)
    # NOTE: slab construction (scatter/padding) is plain XLA and dominates wall-clock vs.
    # the sub-microsecond kernel — cache it per (graph, parameters) in real use.
    slab = pack_sage_slab(layout, a_hat, x, w1, b1, w2, b2, wf1, bf1, pool, wf2, bf2)
    out = run_sage_kernel(layout, slab)

    ge = out[:num_graphs, :h_fc1]
    pred = out[:num_graphs, h_fc1:h_fc1 + n_labels]
    return ge, pred


# ----------------------------- plain-JAX glue ---------------------------------
def build_norm_adj(edge_index, num_nodes):
    """GCNConv propagation matrix: D^{-1/2} (A + I) D^{-1/2}, aggregating src -> dst."""
    src, dst = edge_index[0], edge_index[1]
    a = jnp.zeros((num_nodes, num_nodes), jnp.float32)
    a = a.at[dst, src].add(1.0)
    a = a + jnp.eye(num_nodes, dtype=jnp.float32)          # self loops
    deg = a.sum(axis=1)
    d_inv_sqrt = jnp.where(deg > 0, jax.lax.rsqrt(deg), 0.0)
    return a * d_inv_sqrt[:, None] * d_inv_sqrt[None, :]


def build_pool_matrix(batch, num_graphs):
    """global_mean_pool as a (G, N) matrix: row g has 1/|graph g| on its member nodes."""
    onehot = (batch[None, :] == jnp.arange(num_graphs)[:, None]).astype(jnp.float32)
    counts = onehot.sum(axis=1, keepdims=True)
    return onehot / jnp.maximum(counts, 1.0)


def reference_forward(a_hat, x, w1, b1, w2, b2, wf1, bf1, pool, wf2, bf2):
    # Original module order: GCN1 -> GCN2 -> fc1 -> (dropout, identity in eval) -> pool -> fc2.
    h1 = jax.nn.relu(a_hat @ (x @ w1) + b1)
    h2 = jax.nn.relu(a_hat @ (h1 @ w2) + b2)
    af1 = h2 @ wf1 + bf1
    ge = pool @ af1
    pred = ge @ wf2 + bf2
    return ge, pred


# --------------------------------- main ---------------------------------------
if __name__ == "__main__":
    # args: first_gcn_dimensions=16, second_gcn_dimensions=16,
    #       first_dense_neurons=4, second_dense_neurons=2, first_dense_dimensions=4
    # number_of_features=8, number_of_labels=4
    N_NODES = 16
    N_FEATS = 8
    D_GCN1 = 16
    D_GCN2 = 16
    FIRST_DENSE_NEURONS = 4
    SECOND_DENSE_NEURONS = 2
    FIRST_DENSE_DIMENSIONS = 4          # must equal FIRST_DENSE_NEURONS for fc2 to apply
    N_LABELS = 4
    N_GRAPHS = 2

    H_FC1 = FIRST_DENSE_NEURONS * SECOND_DENSE_NEURONS          # fc1 out dim = 8
    H_FC2_IN = FIRST_DENSE_DIMENSIONS * SECOND_DENSE_NEURONS    # fc2 in dim  = 8

    key = jax.random.PRNGKey(0)
    ks = jax.random.split(key, 12)

    # Node features.
    x = jax.random.normal(ks[0], (N_NODES, N_FEATS), jnp.float32)

    # Two graphs of 8 nodes each; ring edges in both directions inside each graph.
    batch = jnp.concatenate([jnp.zeros(8, jnp.int32), jnp.ones(8, jnp.int32)])
    src_list, dst_list = [], []
    for g0 in (0, 8):
        for i in range(8):
            u, v = g0 + i, g0 + (i + 1) % 8
            src_list += [u, v]
            dst_list += [v, u]
    edge_index = jnp.array([src_list, dst_list], dtype=jnp.int32)

    # Deterministic parameter init (glorot-ish scale); Linear weights stored as (in, out).
    def init_w(k, fan_in, fan_out):
        scale = jnp.sqrt(2.0 / (fan_in + fan_out)).astype(jnp.float32)
        return scale * jax.random.normal(k, (fan_in, fan_out), jnp.float32)

    w1 = init_w(ks[1], N_FEATS, D_GCN1)
    b1 = 0.01 * jax.random.normal(ks[2], (1, D_GCN1), jnp.float32)
    w2 = init_w(ks[3], D_GCN1, D_GCN2)
    b2 = 0.01 * jax.random.normal(ks[4], (1, D_GCN2), jnp.float32)
    wf1 = init_w(ks[5], D_GCN2, H_FC1)
    bf1 = 0.01 * jax.random.normal(ks[6], (1, H_FC1), jnp.float32)
    wf2 = init_w(ks[7], H_FC2_IN, N_LABELS)
    bf2 = 0.01 * jax.random.normal(ks[8], (1, N_LABELS), jnp.float32)

    # Precomputed once per graph / parameter set (plain-XLA work outside the kernel).
    a_hat = build_norm_adj(edge_index, N_NODES)
    pool = build_pool_matrix(batch, N_GRAPHS)

    # TODO(synk): dropout (training=True path) and the constant-zero `penalty` scalar are
    # host-side trivia; dropout is identity in eval mode and penalty is always 0.0.
    # NOTE: pooling before fc assumes every graph has >= 1 node (true for this fixture);
    # an empty graph would pick up the fc1 bias where the reference would emit zeros.
    graph_embedding, ic_predictions = sage_forward(
        a_hat, x, w1, b1, w2, b2, wf1, bf1, pool, wf2, bf2,
        num_graphs=N_GRAPHS, n_labels=N_LABELS)
    jax.block_until_ready((graph_embedding, ic_predictions))
    penalty = 0.0  # matches the module's constant penalty

    ge_ref, pred_ref = reference_forward(
        a_hat, x, w1, b1, w2, b2, wf1, bf1, pool, wf2, bf2)
    assert graph_embedding.shape == (N_GRAPHS, H_FC1)
    assert ic_predictions.shape == (N_GRAPHS, N_LABELS)
    assert jnp.allclose(graph_embedding, ge_ref, atol=1e-4, rtol=1e-4)
    assert jnp.allclose(ic_predictions, pred_ref, atol=1e-4, rtol=1e-4)

    print("KERNEL_OK")
</pallas_src>

<mosaic_0001>
module attributes {stable_mosaic.version = 11 : i64} {
  func.func @sage_kernel(%arg0: memref<104x128xf32, #tpu.memory_space<vmem>>, %arg1: memref<8x128xf32, #tpu.memory_space<vmem>>) attributes {dimension_semantics = [], scalar_prefetch = 0 : i64, scratch_operands = 0 : i64, tpu.core_type = #tpu.core_type<tc>} {
    %c0 = arith.constant 0 : index
    %c0_0 = arith.constant 0 : index
    %0 = vector.load %arg0[%c0, %c0_0] : memref<104x128xf32, #tpu.memory_space<vmem>>, vector<16x16xf32>
    %c16 = arith.constant 16 : index
    %c0_1 = arith.constant 0 : index
    %1 = vector.load %arg0[%c16, %c0_1] : memref<104x128xf32, #tpu.memory_space<vmem>>, vector<16x8xf32>
    %c32 = arith.constant 32 : index
    %c0_2 = arith.constant 0 : index
    %2 = vector.load %arg0[%c32, %c0_2] : memref<104x128xf32, #tpu.memory_space<vmem>>, vector<8x16xf32>
    %c40 = arith.constant 40 : index
    %c0_3 = arith.constant 0 : index
    %3 = vector.load %arg0[%c40, %c0_3] : memref<104x128xf32, #tpu.memory_space<vmem>>, vector<1x16xf32>
    %c48 = arith.constant 48 : index
    %c0_4 = arith.constant 0 : index
    %4 = vector.load %arg0[%c48, %c0_4] : memref<104x128xf32, #tpu.memory_space<vmem>>, vector<16x16xf32>
    %c64 = arith.constant 64 : index
    %c0_5 = arith.constant 0 : index
    %5 = vector.load %arg0[%c64, %c0_5] : memref<104x128xf32, #tpu.memory_space<vmem>>, vector<1x16xf32>
    %c72 = arith.constant 72 : index
    %c0_6 = arith.constant 0 : index
    %6 = vector.load %arg0[%c72, %c0_6] : memref<104x128xf32, #tpu.memory_space<vmem>>, vector<8x16xf32>
    %c80 = arith.constant 80 : index
    %c0_7 = arith.constant 0 : index
    %7 = vector.load %arg0[%c80, %c0_7] : memref<104x128xf32, #tpu.memory_space<vmem>>, vector<16x128xf32>
    %c96 = arith.constant 96 : index
    %c0_8 = arith.constant 0 : index
    %8 = vector.load %arg0[%c96, %c0_8] : memref<104x128xf32, #tpu.memory_space<vmem>>, vector<1x128xf32>
    %cst = arith.constant dense<0.000000e+00> : vector<16x16xf32>
    %9 = tpu.matmul %1, %2, %cst {dimension_numbers = #tpu.dot_dimension_numbers<[1], [0], [0], [1], [0, 0, 1, 1], [], []>} : vector<16x8xf32>, vector<8x16xf32>, vector<16x16xf32> -> vector<16x16xf32>
    %cst_9 = arith.constant dense<0.000000e+00> : vector<16x16xf32>
    %10 = tpu.matmul %0, %9, %cst_9 {dimension_numbers = #tpu.dot_dimension_numbers<[1], [0], [0], [1], [0, 0, 1, 1], [], []>} : vector<16x16xf32>, vector<16x16xf32>, vector<16x16xf32> -> vector<16x16xf32>
    %11 = vector.broadcast %3 : vector<1x16xf32> to vector<16x16xf32>
    %12 = arith.addf %10, %11 : vector<16x16xf32>
    %cst_10 = arith.constant 0.000000e+00 : f32
    %13 = vector.broadcast %cst_10 : f32 to vector<16x16xf32>
    %14 = arith.maximumf %12, %13 : vector<16x16xf32>
    %cst_11 = arith.constant dense<0.000000e+00> : vector<16x16xf32>
    %15 = tpu.matmul %14, %4, %cst_11 {dimension_numbers = #tpu.dot_dimension_numbers<[1], [0], [0], [1], [0, 0, 1, 1], [], []>} : vector<16x16xf32>, vector<16x16xf32>, vector<16x16xf32> -> vector<16x16xf32>
    %cst_12 = arith.constant dense<0.000000e+00> : vector<16x16xf32>
    %16 = tpu.matmul %0, %15, %cst_12 {dimension_numbers = #tpu.dot_dimension_numbers<[1], [0], [0], [1], [0, 0, 1, 1], [], []>} : vector<16x16xf32>, vector<16x16xf32>, vector<16x16xf32> -> vector<16x16xf32>
    %17 = vector.broadcast %5 : vector<1x16xf32> to vector<16x16xf32>
    %18 = arith.addf %16, %17 : vector<16x16xf32>
    %cst_13 = arith.constant 0.000000e+00 : f32
    %19 = vector.broadcast %cst_13 : f32 to vector<16x16xf32>
    %20 = arith.maximumf %18, %19 : vector<16x16xf32>
    %cst_14 = arith.constant dense<0.000000e+00> : vector<8x16xf32>
    %21 = tpu.matmul %6, %20, %cst_14 {dimension_numbers = #tpu.dot_dimension_numbers<[1], [0], [0], [1], [0, 0, 1, 1], [], []>} : vector<8x16xf32>, vector<16x16xf32>, vector<8x16xf32> -> vector<8x16xf32>
    %cst_15 = arith.constant dense<0.000000e+00> : vector<8x128xf32>
    %22 = tpu.matmul %21, %7, %cst_15 {dimension_numbers = #tpu.dot_dimension_numbers<[1], [0], [0], [1], [0, 0, 1, 1], [], []>} : vector<8x16xf32>, vector<16x128xf32>, vector<8x128xf32> -> vector<8x128xf32>
    %23 = vector.broadcast %8 : vector<1x128xf32> to vector<8x128xf32>
    %24 = arith.addf %22, %23 : vector<8x128xf32>
    %c0_16 = arith.constant 0 : index
    %c0_17 = arith.constant 0 : index
    %25 = vector.load %arg1[%c0_16, %c0_17] : memref<8x128xf32, #tpu.memory_space<vmem>>, vector<8x128xf32>
    tpu.vector_store %arg1[%c0_16, %c0_17], %24 {strides = array<i32>} : memref<8x128xf32, #tpu.memory_space<vmem>>, vector<8x128xf32>,
    return
  }
}

</mosaic_0001>

<llo_original>
// kernel: tpu_custom_call.1
$region0: #{tpu_custom_call.1}
  #allocation0 [shape = 'u32[]', space=smem, size = 0x4, offset = 0x4, fixed_abs, tag = 'smem constant byte address 0x4 - core index']
  #allocation1 [shape = 'u32[144,128]{1,0:T(1,128)}', space=vmem, size = 0x12000, scoped, tag = 'internal scratch']
  %s0 = inlined_call_operand.hbm [shape: f32[104,128], index: 0, kind: input, shape index: {}]
  %s1 = inlined_call_operand.hbm [shape: f32[8,128], index: 1, kind: output, shape index: {}]
  %s2 = sld [smem:[#allocation0]]
  $region18: #{tpu_custom_call.1} parent=0
    _
  %s4 = ssub.s32 1, %s2
  %s5 = scalar_select 0, %s4, %s2
  $region1: #{tpu_custom_call.1} parent=0
    #allocation2 [shape = 'u8[53248]{0}', space=vmem, size = 0xd000, scoped, tag = 'input window, operand 0, single buffered']
    #allocation3 [shape = 's32[1]{0}', space=sflag, size = 0x4, scoped, tag = 'scoped memory for tpu_custom_call.1']
    #allocation4 [shape = 's32[1]{0}', space=sflag, size = 0x4, scoped, tag = 'scoped memory for tpu_custom_call.1']
    #allocation5 [shape = 'u8[4096]{0}', space=vmem, size = 0x1000, scoped, tag = 'output window, operand 0, single buffered']
    %6 = vsyncpa [#allocation3], 0
    %7 = vsyncpa [#allocation4], 0
    // Predicated region
    $region2: #{tpu_custom_call.1} parent=1 // pred_check
      _
    $region3: #{tpu_custom_call.1} parent=1 // pred_check_branch
      %9 = sbr.rel (0) target = $region5
    $region4: #{tpu_custom_call.1} parent=1 // pred_region
      %s11 = ssub.s32 1664, 1664
      %12 = vsyncadd [#allocation3], %s11
      %s13 = sshll.u32 [#allocation2], 4
      %s14 = int_to_ptr.vmem [resolvable:$true] %s13
      %19 = dma.hbm_to_vmem [thread:$0]  %s0, 1664, %s14, [#allocation3], 128, 128, 8
    $region5: #{tpu_custom_call.1} parent=1 // pred_fallthru
      _
    // Predicated region
    $region6: #{tpu_custom_call.1} parent=1 // pred_check
      _
    $region7: #{tpu_custom_call.1} parent=1 // pred_check_branch
      %21 = sbr.rel (0) target = $region9
    $region8: #{tpu_custom_call.1} parent=1 // pred_region
      %22 = dma.done [#allocation3], 1664
    $region9: #{tpu_custom_call.1} parent=1 // pred_fallthru
      _
    %v23 = vld [vmem:[#allocation2] sm:$0xff]
    %v24 = vld [vmem:[#allocation2 + $0x8] sm:$0xff]
    %v25 = vld [vmem:[#allocation2 + $0x10] sm:$0xff]
    %v26 = vld [vmem:[#allocation2 + $0x18] sm:$0xff]
    %v27 = vld [vmem:[#allocation2 + $0x20] sm:$0xff]
    %v28 = vld [vmem:[#allocation2 + $0x28] sm:$0x1]
    %v29 = vld [vmem:[#allocation2 + $0x30] sm:$0xff]
    %v30 = vld [vmem:[#allocation2 + $0x38] sm:$0xff]
    %v31 = vld [vmem:[#allocation2 + $0x40] sm:$0x1]
    %v32 = vld [vmem:[#allocation2 + $0x48] sm:$0xff]
    %v33 = vld [vmem:[#allocation2 + $0x50] sm:$0xff]
    %v34 = vld [vmem:[#allocation2 + $0x58] sm:$0xff]
    %v35 = vld [vmem:[#allocation2 + $0x60] sm:$0x1]
    %vm36 = vcmask 64512
    %v38 = vsel %vm36, %v25, 0
    %v41 = vsel %vm36, %v26, 0
    %43 = vmatprep.subr.mxu0 0.0
    %44 = vmatpush1.msra.mxu0 %v27
    %45 = vmatprep.subr.mxu0 0.0
    %46 = vmatpush1.msra.mxu0 0.0
    %47 = vmatprep.subr.mxu0 0.0
    %48 = vmatpush1.msra.mxu0 0.0
    %49 = vmatprep.subr.mxu0 0.0
    %50 = vmatpush1.msra.mxu0 0.0
    %51 = vmatprep.subr.mxu0 0.0
    %52 = vmatpush1.msra.mxu0 0.0
    %53 = vmatprep.subr.mxu0 0.0
    %54 = vmatpush1.msra.mxu0 0.0
    %55 = vmatprep.subr.mxu0 0.0
    %56 = vmatpush1.msra.mxu0 0.0
    %57 = vmatprep.subr.mxu0 0.0
    %58 = vmatpush1.msra.mxu0 0.0
    %59 = vmatprep.subr.mxu0 0.0
    %60 = vmatpush1.msra.mxu0 0.0
    %61 = vmatprep.subr.mxu0 0.0
    %62 = vmatpush1.msra.mxu0 0.0
    %63 = vmatprep.subr.mxu0 0.0
    %64 = vmatpush1.msra.mxu0 0.0
    %65 = vmatprep.subr.mxu0 0.0
    %66 = vmatpush1.msra.mxu0 0.0
    %67 = vmatprep.subr.mxu0 0.0
    %68 = vmatpush1.msra.mxu0 0.0
    %69 = vmatprep.subr.mxu0 0.0
    %70 = vmatpush1.msra.mxu0 0.0
    %71 = vmatprep.subr.mxu0 0.0
    %72 = vmatpush1.msra.mxu0 0.0
    %73 = vmatprep.subr.mxu0 0.0
    %74 = vmatpush1.msra.mxu0 0.0
    %75 = vmatprep.subr.mxu0 0.0
    %76 = vmatpush1.msra.mxu0 0.0
    %77 = vmatprep.subr.mxu0 0.0
    %78 = vmatpush1.msra.mxu0 0.0
    %79 = vmatprep.subr.mxu0 0.0
    %80 = vmatpush1.msra.mxu0 0.0
    %81 = vmatprep.subr.mxu0 0.0
    %82 = vmatpush1.msra.mxu0 0.0
    %83 = vmatprep.subr.mxu0 0.0
    %84 = vmatpush1.msra.mxu0 0.0
    %85 = vmatprep.subr.mxu0 0.0
    %86 = vmatpush1.msra.mxu0 0.0
    %87 = vmatprep.subr.mxu0 0.0
    %88 = vmatpush1.msra.mxu0 0.0
    %89 = vmatprep.subr.mxu0 0.0
    %90 = vmatpush1.msra.mxu0 0.0
    %91 = vmatprep.subr.mxu0 0.0
    %92 = vmatpush1.msra.mxu0 0.0
    %93 = vmatprep.subr.mxu0 0.0
    %94 = vmatpush1.msra.mxu0 0.0
    %95 = vmatprep.subr.mxu0 0.0
    %96 = vmatpush1.msra.mxu0 0.0
    %97 = vmatprep.subr.mxu0 0.0
    %98 = vmatpush1.msra.mxu0 0.0
    %99 = vmatprep.subr.mxu0 0.0
    %100 = vmatpush1.msra.mxu0 0.0
    %101 = vmatprep.subr.mxu0 0.0
    %102 = vmatpush1.msra.mxu0 0.0
    %103 = vmatprep.subr.mxu0 0.0
    %104 = vmatpush1.msra.mxu0 0.0
    %105 = vmatprep.subr.mxu0 0.0
    %106 = vmatpush1.msra.mxu0 0.0
    %107 = vmatprep.mubr.f32.mxu0 0.0
    %108 = vmatmul.mubr.f32.gmra.mrb[0].mxu0 %v38
    %v109 = vpop.f32.mrb[0].mxu0
    %v110 = vadd.f32 0.0, %v109
    %v111 = vpop.f32.mrb[0].mxu0
    %112 = vmatprep.mubr.f32.mxu0 0.0
    %113 = vmatmul.mubr.f32.gmra.mrb[0].mxu0 %v41
    %v114 = vpop.f32.mrb[0].mxu0
    %v115 = vadd.f32 0.0, %v114
    %v116 = vpop.f32.mrb[0].mxu0
    %117 = vdwg.mxu0
    %v118 = vlaneseq
    %v119 = vshrl.u32 %v118, 7
    %v120 = vsub.s32 0, %v119
    %v121 = vrot.slane %v28, %v120
    %vm122 = vcmask 130048
    %v124 = vsel %vm122, %v23, 0
    %v127 = vsel %vm122, %v24, 0
    %129 = vmatprep.subr.mxu0 0.0
    %130 = vmatpush1.msra.mxu0 %v110
    %131 = vmatprep.subr.mxu0 0.0
    %132 = vmatpush1.msra.mxu0 %v115
    %133 = vmatprep.subr.mxu0 0.0
    %134 = vmatpush1.msra.mxu0 0.0
    %135 = vmatprep.subr.mxu0 0.0
    %136 = vmatpush1.msra.mxu0 0.0
    %137 = vmatprep.subr.mxu0 0.0
    %138 = vmatpush1.msra.mxu0 0.0
    %139 = vmatprep.subr.mxu0 0.0
    %140 = vmatpush1.msra.mxu0 0.0
    %141 = vmatprep.subr.mxu0 0.0
    %142 = vmatpush1.msra.mxu0 0.0
    %143 = vmatprep.subr.mxu0 0.0
    %144 = vmatpush1.msra.mxu0 0.0
    %145 = vmatprep.subr.mxu0 0.0
    %146 = vmatpush1.msra.mxu0 0.0
    %147 = vmatprep.subr.mxu0 0.0
    %148 = vmatpush1.msra.mxu0 0.0
    %149 = vmatprep.subr.mxu0 0.0
    %150 = vmatpush1.msra.mxu0 0.0
    %151 = vmatprep.subr.mxu0 0.0
    %152 = vmatpush1.msra.mxu0 0.0
    %153 = vmatprep.subr.mxu0 0.0
    %154 = vmatpush1.msra.mxu0 0.0
    %155 = vmatprep.subr.mxu0 0.0
    %156 = vmatpush1.msra.mxu0 0.0
    %157 = vmatprep.subr.mxu0 0.0
    %158 = vmatpush1.msra.mxu0 0.0
    %159 = vmatprep.subr.mxu0 0.0
    %160 = vmatpush1.msra.mxu0 0.0
    %161 = vmatprep.subr.mxu0 0.0
    %162 = vmatpush1.msra.mxu0 0.0
    %163 = vmatprep.subr.mxu0 0.0
    %164 = vmatpush1.msra.mxu0 0.0
    %165 = vmatprep.subr.mxu0 0.0
    %166 = vmatpush1.msra.mxu0 0.0
    %167 = vmatprep.subr.mxu0 0.0
    %168 = vmatpush1.msra.mxu0 0.0
    %169 = vmatprep.subr.mxu0 0.0
    %170 = vmatpush1.msra.mxu0 0.0
    %171 = vmatprep.subr.mxu0 0.0
    %172 = vmatpush1.msra.mxu0 0.0
    %173 = vmatprep.subr.mxu0 0.0
    %174 = vmatpush1.msra.mxu0 0.0
    %175 = vmatprep.subr.mxu0 0.0
    %176 = vmatpush1.msra.mxu0 0.0
    %177 = vmatprep.subr.mxu0 0.0
    %178 = vmatpush1.msra.mxu0 0.0
    %179 = vmatprep.subr.mxu0 0.0
    %180 = vmatpush1.msra.mxu0 0.0
    %181 = vmatprep.subr.mxu0 0.0
    %182 = vmatpush1.msra.mxu0 0.0
    %183 = vmatprep.subr.mxu0 0.0
    %184 = vmatpush1.msra.mxu0 0.0
    %185 = vmatprep.subr.mxu0 0.0
    %186 = vmatpush1.msra.mxu0 0.0
    %187 = vmatprep.subr.mxu0 0.0
    %188 = vmatpush1.msra.mxu0 0.0
    %189 = vmatprep.subr.mxu0 0.0
    %190 = vmatpush1.msra.mxu0 0.0
    %191 = vmatprep.subr.mxu0 0.0
    %192 = vmatpush1.msra.mxu0 0.0
    %193 = vmatprep.mubr.f32.mxu0 0.0
    %194 = vmatmul.mubr.f32.gmra.mrb[0].mxu0 %v124
    %v195 = vpop.f32.mrb[0].mxu0
    %v196 = vadd.f32 %v121, %v195
    %v197 = vpop.f32.mrb[0].mxu0
    %198 = vmatprep.mubr.f32.mxu0 0.0
    %199 = vmatmul.mubr.f32.gmra.mrb[0].mxu0 %v127
    %v200 = vpop.f32.mrb[0].mxu0
    %v201 = vadd.f32 %v121, %v200
    %v202 = vpop.f32.mrb[0].mxu0
    %203 = vdwg.mxu0
    %v204 = vmax.f32 %v196, 0.0
    %v205 = vmax.f32 %v201, 0.0
    %v207 = vsel %vm122, %v204, 0
    %v210 = vsel %vm122, %v205, 0
    %212 = vmatprep.subr.mxu0 0.0
    %213 = vmatpush1.msra.mxu0 %v29
    %214 = vmatprep.subr.mxu0 0.0
    %215 = vmatpush1.msra.mxu0 %v30
    %216 = vmatprep.subr.mxu0 0.0
    %217 = vmatpush1.msra.mxu0 0.0
    %218 = vmatprep.subr.mxu0 0.0
    %219 = vmatpush1.msra.mxu0 0.0
    %220 = vmatprep.subr.mxu0 0.0
    %221 = vmatpush1.msra.mxu0 0.0
    %222 = vmatprep.subr.mxu0 0.0
    %223 = vmatpush1.msra.mxu0 0.0
    %224 = vmatprep.subr.mxu0 0.0
    %225 = vmatpush1.msra.mxu0 0.0
    %226 = vmatprep.subr.mxu0 0.0
    %227 = vmatpush1.msra.mxu0 0.0
    %228 = vmatprep.subr.mxu0 0.0
    %229 = vmatpush1.msra.mxu0 0.0
    %230 = vmatprep.subr.mxu0 0.0
    %231 = vmatpush1.msra.mxu0 0.0
    %232 = vmatprep.subr.mxu0 0.0
    %233 = vmatpush1.msra.mxu0 0.0
    %234 = vmatprep.subr.mxu0 0.0
    %235 = vmatpush1.msra.mxu0 0.0
    %236 = vmatprep.subr.mxu0 0.0
    %237 = vmatpush1.msra.mxu0 0.0
    %238 = vmatprep.subr.mxu0 0.0
    %239 = vmatpush1.msra.mxu0 0.0
    %240 = vmatprep.subr.mxu0 0.0
    %241 = vmatpush1.msra.mxu0 0.0
    %242 = vmatprep.subr.mxu0 0.0
    %243 = vmatpush1.msra.mxu0 0.0
    %244 = vmatprep.subr.mxu0 0.0
    %245 = vmatpush1.msra.mxu0 0.0
    %246 = vmatprep.subr.mxu0 0.0
    %247 = vmatpush1.msra.mxu0 0.0
    %248 = vmatprep.subr.mxu0 0.0
    %249 = vmatpush1.msra.mxu0 0.0
    %250 = vmatprep.subr.mxu0 0.0
    %251 = vmatpush1.msra.mxu0 0.0
    %252 = vmatprep.subr.mxu0 0.0
    %253 = vmatpush1.msra.mxu0 0.0
    %254 = vmatprep.subr.mxu0 0.0
    %255 = vmatpush1.msra.mxu0 0.0
    %256 = vmatprep.subr.mxu0 0.0
    %257 = vmatpush1.msra.mxu0 0.0
    %258 = vmatprep.subr.mxu0 0.0
    %259 = vmatpush1.msra.mxu0 0.0
    %260 = vmatprep.subr.mxu0 0.0
    %261 = vmatpush1.msra.mxu0 0.0
    %262 = vmatprep.subr.mxu0 0.0
    %263 = vmatpush1.msra.mxu0 0.0
    %264 = vmatprep.subr.mxu0 0.0
    %265 = vmatpush1.msra.mxu0 0.0
    %266 = vmatprep.subr.mxu0 0.0
    %267 = vmatpush1.msra.mxu0 0.0
    %268 = vmatprep.subr.mxu0 0.0
    %269 = vmatpush1.msra.mxu0 0.0
    %270 = vmatprep.subr.mxu0 0.0
    %271 = vmatpush1.msra.mxu0 0.0
    %272 = vmatprep.subr.mxu0 0.0
    %273 = vmatpush1.msra.mxu0 0.0
    %274 = vmatprep.subr.mxu0 0.0
    %275 = vmatpush1.msra.mxu0 0.0
    %276 = vmatprep.mubr.f32.mxu0 0.0
    %277 = vmatmul.mubr.f32.gmra.mrb[0].mxu0 %v207
    %v278 = vpop.f32.mrb[0].mxu0
    %v279 = vadd.f32 0.0, %v278
    %v280 = vpop.f32.mrb[0].mxu0
    %281 = vmatprep.mubr.f32.mxu0 0.0
    %282 = vmatmul.mubr.f32.gmra.mrb[0].mxu0 %v210
    %v283 = vpop.f32.mrb[0].mxu0
    %v284 = vadd.f32 0.0, %v283
    %v285 = vpop.f32.mrb[0].mxu0
    %286 = vdwg.mxu0
    %v287 = vlaneseq
    %v288 = vshrl.u32 %v287, 7
    %v289 = vsub.s32 0, %v288
    %v290 = vrot.slane %v31, %v289
    %291 = vmatprep.subr.mxu0 0.0
    %292 = vmatpush1.msra.mxu0 %v279
    %293 = vmatprep.subr.mxu0 0.0
    %294 = vmatpush1.msra.mxu0 %v284
    %295 = vmatprep.subr.mxu0 0.0
    %296 = vmatpush1.msra.mxu0 0.0
    %297 = vmatprep.subr.mxu0 0.0
    %298 = vmatpush1.msra.mxu0 0.0
    %299 = vmatprep.subr.mxu0 0.0
    %300 = vmatpush1.msra.mxu0 0.0
    %301 = vmatprep.subr.mxu0 0.0
    %302 = vmatpush1.msra.mxu0 0.0
    %303 = vmatprep.subr.mxu0 0.0
    %304 = vmatpush1.msra.mxu0 0.0
    %305 = vmatprep.subr.mxu0 0.0
    %306 = vmatpush1.msra.mxu0 0.0
    %307 = vmatprep.subr.mxu0 0.0
    %308 = vmatpush1.msra.mxu0 0.0
    %309 = vmatprep.subr.mxu0 0.0
    %310 = vmatpush1.msra.mxu0 0.0
    %311 = vmatprep.subr.mxu0 0.0
    %312 = vmatpush1.msra.mxu0 0.0
    %313 = vmatprep.subr.mxu0 0.0
    %314 = vmatpush1.msra.mxu0 0.0
    %315 = vmatprep.subr.mxu0 0.0
    %316 = vmatpush1.msra.mxu0 0.0
    %317 = vmatprep.subr.mxu0 0.0
    %318 = vmatpush1.msra.mxu0 0.0
    %319 = vmatprep.subr.mxu0 0.0
    %320 = vmatpush1.msra.mxu0 0.0
    %321 = vmatprep.subr.mxu0 0.0
    %322 = vmatpush1.msra.mxu0 0.0
    %323 = vmatprep.subr.mxu0 0.0
    %324 = vmatpush1.msra.mxu0 0.0
    %325 = vmatprep.subr.mxu0 0.0
    %326 = vmatpush1.msra.mxu0 0.0
    %327 = vmatprep.subr.mxu0 0.0
    %328 = vmatpush1.msra.mxu0 0.0
    %329 = vmatprep.subr.mxu0 0.0
    %330 = vmatpush1.msra.mxu0 0.0
    %331 = vmatprep.subr.mxu0 0.0
    %332 = vmatpush1.msra.mxu0 0.0
    %333 = vmatprep.subr.mxu0 0.0
    %334 = vmatpush1.msra.mxu0 0.0
    %335 = vmatprep.subr.mxu0 0.0
    %336 = vmatpush1.msra.mxu0 0.0
    %337 = vmatprep.subr.mxu0 0.0
    %338 = vmatpush1.msra.mxu0 0.0
    %339 = vmatprep.subr.mxu0 0.0
    %340 = vmatpush1.msra.mxu0 0.0
    %341 = vmatprep.subr.mxu0 0.0
    %342 = vmatpush1.msra.mxu0 0.0
    %343 = vmatprep.subr.mxu0 0.0
    %344 = vmatpush1.msra.mxu0 0.0
    %345 = vmatprep.subr.mxu0 0.0
    %346 = vmatpush1.msra.mxu0 0.0
    %347 = vmatprep.subr.mxu0 0.0
    %348 = vmatpush1.msra.mxu0 0.0
    %349 = vmatprep.subr.mxu0 0.0
    %350 = vmatpush1.msra.mxu0 0.0
    %351 = vmatprep.subr.mxu0 0.0
    %352 = vmatpush1.msra.mxu0 0.0
    %353 = vmatprep.subr.mxu0 0.0
    %354 = vmatpush1.msra.mxu0 0.0
    %355 = vmatprep.mubr.f32.mxu0 0.0
    %356 = vmatmul.mubr.f32.gmra.mrb[0].mxu0 %v124
    %v357 = vpop.f32.mrb[0].mxu0
    %v358 = vadd.f32 %v290, %v357
    %v359 = vpop.f32.mrb[0].mxu0
    %360 = vmatprep.mubr.f32.mxu0 0.0
    %361 = vmatmul.mubr.f32.gmra.mrb[0].mxu0 %v127
    %v362 = vpop.f32.mrb[0].mxu0
    %v363 = vadd.f32 %v290, %v362
    %v364 = vpop.f32.mrb[0].mxu0
    %365 = vdwg.mxu0
    %v366 = vmax.f32 %v358, 0.0
    %v367 = vmax.f32 %v363, 0.0
    %v369 = vsel %vm122, %v32, 0
    %371 = vmatprep.subr.mxu0 0.0
    %372 = vmatpush1.msra.mxu0 %v366
    %373 = vmatprep.subr.mxu0 0.0
    %374 = vmatpush1.msra.mxu0 %v367
    %375 = vmatprep.subr.mxu0 0.0
    %376 = vmatpush1.msra.mxu0 0.0
    %377 = vmatprep.subr.mxu0 0.0
    %378 = vmatpush1.msra.mxu0 0.0
    %379 = vmatprep.subr.mxu0 0.0
    %380 = vmatpush1.msra.mxu0 0.0
    %381 = vmatprep.subr.mxu0 0.0
    %382 = vmatpush1.msra.mxu0 0.0
    %383 = vmatprep.subr.mxu0 0.0
    %384 = vmatpush1.msra.mxu0 0.0
    %385 = vmatprep.subr.mxu0 0.0
    %386 = vmatpush1.msra.mxu0 0.0
    %387 = vmatprep.subr.mxu0 0.0
    %388 = vmatpush1.msra.mxu0 0.0
    %389 = vmatprep.subr.mxu0 0.0
    %390 = vmatpush1.msra.mxu0 0.0
    %391 = vmatprep.subr.mxu0 0.0
    %392 = vmatpush1.msra.mxu0 0.0
    %393 = vmatprep.subr.mxu0 0.0
    %394 = vmatpush1.msra.mxu0 0.0
    %395 = vmatprep.subr.mxu0 0.0
    %396 = vmatpush1.msra.mxu0 0.0
    %397 = vmatprep.subr.mxu0 0.0
    %398 = vmatpush1.msra.mxu0 0.0
    %399 = vmatprep.subr.mxu0 0.0
    %400 = vmatpush1.msra.mxu0 0.0
    %401 = vmatprep.subr.mxu0 0.0
    %402 = vmatpush1.msra.mxu0 0.0
    %403 = vmatprep.subr.mxu0 0.0
    %404 = vmatpush1.msra.mxu0 0.0
    %405 = vmatprep.subr.mxu0 0.0
    %406 = vmatpush1.msra.mxu0 0.0
    %407 = vmatprep.subr.mxu0 0.0
    %408 = vmatpush1.msra.mxu0 0.0
    %409 = vmatprep.subr.mxu0 0.0
    %410 = vmatpush1.msra.mxu0 0.0
    %411 = vmatprep.subr.mxu0 0.0
    %412 = vmatpush1.msra.mxu0 0.0
    %413 = vmatprep.subr.mxu0 0.0
    %414 = vmatpush1.msra.mxu0 0.0
    %415 = vmatprep.subr.mxu0 0.0
    %416 = vmatpush1.msra.mxu0 0.0
    %417 = vmatprep.subr.mxu0 0.0
    %418 = vmatpush1.msra.mxu0 0.0
    %419 = vmatprep.subr.mxu0 0.0
    %420 = vmatpush1.msra.mxu0 0.0
    %421 = vmatprep.subr.mxu0 0.0
    %422 = vmatpush1.msra.mxu0 0.0
    %423 = vmatprep.subr.mxu0 0.0
    %424 = vmatpush1.msra.mxu0 0.0
    %425 = vmatprep.subr.mxu0 0.0
    %426 = vmatpush1.msra.mxu0 0.0
    %427 = vmatprep.subr.mxu0 0.0
    %428 = vmatpush1.msra.mxu0 0.0
    %429 = vmatprep.subr.mxu0 0.0
    %430 = vmatpush1.msra.mxu0 0.0
    %431 = vmatprep.subr.mxu0 0.0
    %432 = vmatpush1.msra.mxu0 0.0
    %433 = vmatprep.subr.mxu0 0.0
    %434 = vmatpush1.msra.mxu0 0.0
    %435 = vmatprep.mubr.f32.mxu0 0.0
    %436 = vmatmul.mubr.f32.gmra.mrb[0].mxu0 %v369
    %v437 = vpop.f32.mrb[0].mxu0
    %v438 = vadd.f32 0.0, %v437
    %v439 = vpop.f32.mrb[0].mxu0
    %440 = vdwg.mxu0
    %v441 = vlaneseq
    %v442 = vshrl.u32 %v441, 7
    %v443 = vsub.s32 0, %v442
    %v444 = vrot.slane %v35, %v443
    %v446 = vsel %vm122, %v438, 0
    %448 = vmatprep.subr.mxu0 0.0
    %449 = vmatpush1.msra.mxu0 %v33
    %450 = vmatprep.subr.mxu0 0.0
    %451 = vmatpush1.msra.mxu0 %v34
    %452 = vmatprep.subr.mxu0 0.0
    %453 = vmatpush1.msra.mxu0 0.0
    %454 = vmatprep.subr.mxu0 0.0
    %455 = vmatpush1.msra.mxu0 0.0
    %456 = vmatprep.subr.mxu0 0.0
    %457 = vmatpush1.msra.mxu0 0.0
    %458 = vmatprep.subr.mxu0 0.0
    %459 = vmatpush1.msra.mxu0 0.0
    %460 = vmatprep.subr.mxu0 0.0
    %461 = vmatpush1.msra.mxu0 0.0
    %462 = vmatprep.subr.mxu0 0.0
    %463 = vmatpush1.msra.mxu0 0.0
    %464 = vmatprep.subr.mxu0 0.0
    %465 = vmatpush1.msra.mxu0 0.0
    %466 = vmatprep.subr.mxu0 0.0
    %467 = vmatpush1.msra.mxu0 0.0
    %468 = vmatprep.subr.mxu0 0.0
    %469 = vmatpush1.msra.mxu0 0.0
    %470 = vmatprep.subr.mxu0 0.0
    %471 = vmatpush1.msra.mxu0 0.0
    %472 = vmatprep.subr.mxu0 0.0
    %473 = vmatpush1.msra.mxu0 0.0
    %474 = vmatprep.subr.mxu0 0.0
    %475 = vmatpush1.msra.mxu0 0.0
    %476 = vmatprep.subr.mxu0 0.0
    %477 = vmatpush1.msra.mxu0 0.0
    %478 = vmatprep.subr.mxu0 0.0
    %479 = vmatpush1.msra.mxu0 0.0
    %480 = vmatprep.subr.mxu0 0.0
    %481 = vmatpush1.msra.mxu0 0.0
    %482 = vmatprep.subr.mxu0 0.0
    %483 = vmatpush1.msra.mxu0 0.0
    %484 = vmatprep.subr.mxu0 0.0
    %485 = vmatpush1.msra.mxu0 0.0
    %486 = vmatprep.subr.mxu0 0.0
    %487 = vmatpush1.msra.mxu0 0.0
    %488 = vmatprep.subr.mxu0 0.0
    %489 = vmatpush1.msra.mxu0 0.0
    %490 = vmatprep.subr.mxu0 0.0
    %491 = vmatpush1.msra.mxu0 0.0
    %492 = vmatprep.subr.mxu0 0.0
    %493 = vmatpush1.msra.mxu0 0.0
    %494 = vmatprep.subr.mxu0 0.0
    %495 = vmatpush1.msra.mxu0 0.0
    %496 = vmatprep.subr.mxu0 0.0
    %497 = vmatpush1.msra.mxu0 0.0
    %498 = vmatprep.subr.mxu0 0.0
    %499 = vmatpush1.msra.mxu0 0.0
    %500 = vmatprep.subr.mxu0 0.0
    %501 = vmatpush1.msra.mxu0 0.0
    %502 = vmatprep.subr.mxu0 0.0
    %503 = vmatpush1.msra.mxu0 0.0
    %504 = vmatprep.subr.mxu0 0.0
    %505 = vmatpush1.msra.mxu0 0.0
    %506 = vmatprep.subr.mxu0 0.0
    %507 = vmatpush1.msra.mxu0 0.0
    %508 = vmatprep.subr.mxu0 0.0
    %509 = vmatpush1.msra.mxu0 0.0
    %510 = vmatprep.subr.mxu0 0.0
    %511 = vmatpush1.msra.mxu0 0.0
    %512 = vmatprep.mubr.f32.mxu0 0.0
    %513 = vmatmul.mubr.f32.gmra.mrb[0].mxu0 %v446
    %v514 = vpop.f32.mrb[0].mxu0
    %v515 = vadd.f32 %v444, %v514
    %v516 = vpop.f32.mrb[0].mxu0
    %517 = vdwg.mxu0
    %518 = vst [vmem:[#allocation5] sm:$0xff] %v515
    // Predicated region
    $region10: #{tpu_custom_call.1} parent=1 // pred_check
      _
    $region11: #{tpu_custom_call.1} parent=1 // pred_check_branch
      %520 = sbr.rel (0) target = $region13
    $region12: #{tpu_custom_call.1} parent=1 // pred_region
      %s522 = ssub.s32 128, 128
      %523 = vsyncadd [#allocation4], %s522
      %s525 = sshll.u32 [#allocation5], 4
      %s526 = int_to_ptr.vmem [resolvable:$true] %s525
      %528 = dma.vmem_to_hbm [thread:$0]  %s526, 128, %s1, [#allocation4]
    $region13: #{tpu_custom_call.1} parent=1 // pred_fallthru
      _
    // Predicated region
    $region14: #{tpu_custom_call.1} parent=1 // pred_check
      _
    $region15: #{tpu_custom_call.1} parent=1 // pred_check_branch
      %530 = sbr.rel (0) target = $region17
    $region16: #{tpu_custom_call.1} parent=1 // pred_region
      %531 = dma.done [#allocation4], 128
    $region17: #{tpu_custom_call.1} parent=1 // pred_fallthru
      _
    %532 = vsyncpa [#allocation3], 1
    %533 = vsyncpa [#allocation4], 1

</llo_original>
